<compile_context>
chip_gen: v6e
topology: v6e:2x2x1
jax: 0.10.0
libtpu: 0.0.40
codegen_flags: <defaults>
</compile_context>

<pallas_src>
import functools

import jax
import jax.numpy as jnp
from jax.experimental import pallas as pl
from jax.experimental.pallas import tpu as pltpu

_LANES = 128
_HARD_THRESHOLD_LOGIT = 0.4054651081081644  # logit(0.6) = log(0.6 / 0.4) = log(1.5)

_TARGET_BLOCK_BYTES = 8 * 1024 * 1024   # per-block byte budget (same for every dtype)
_VMEM_LIMIT_BYTES = 48 * 1024 * 1024    # explicit scoped-VMEM ceiling (< v7x's 64 MiB)
_MIN_PALLAS_ELEMENTS = 65536            # below this, plain XLA elementwise wins


@functools.lru_cache(maxsize=None)
def _num_tensorcores() -> int:
    """Best-effort TensorCore count of the local chip (1 if unknown)."""
    try:
        info = pltpu.get_tpu_info()
        for attr in ("num_cores", "core_count", "num_tensorcores",
                     "tensorcore_count", "cores_per_chip"):
            v = getattr(info, attr, None)
            if isinstance(v, int) and v >= 1:
                return v
    except Exception:
        pass
    try:
        dev = jax.devices()[0]
        v = getattr(dev, "num_cores", None)
        if isinstance(v, int) and v >= 1:
            return v
        if "v7" in dev.device_kind.lower():
            return 2
    except Exception:
        pass
    return 1


@functools.lru_cache(maxsize=None)
def _supports_native_bf16() -> bool:
    """bf16 VPU/EUP exists on v6e/v7x; v5e must upcast. Default: upcast (safe)."""
    try:
        kind = jax.devices()[0].device_kind.lower()
        return ("v6" in kind) or ("v7" in kind)
    except Exception:
        return False


def _sigmoid_kernel(x_ref, o_ref, *, hard: bool, compute_dtype):
    x = x_ref[...]
    if hard:
        # sigmoid(x) >= 0.6  <=>  x >= logit(0.6): no exp/tanh/reciprocal needed.
        # Compare in the input dtype, select in the output dtype (no cast passes).
        thr = jnp.asarray(_HARD_THRESHOLD_LOGIT, dtype=x.dtype)
        o_ref[...] = jnp.where(x >= thr,
                               jnp.ones((), o_ref.dtype),
                               jnp.zeros((), o_ref.dtype))
    else:
        xc = x.astype(compute_dtype)
        # One EUP push per element: sigmoid(x) = 0.5 * (tanh(0.5 * x) + 1).
        y = 0.5 * (jnp.tanh(xc * 0.5) + 1.0)
        o_ref[...] = y.astype(o_ref.dtype)


def _xla_fallback(logits: jax.Array, force_hard: bool) -> jax.Array:
    out = jax.nn.sigmoid(logits)
    if force_hard:
        out = jnp.where(out >= 0.6, 1.0, 0.0).astype(logits.dtype)
    return out


def sigmoid_pallas(logits: jax.Array, force_hard: bool = False, *,
                   min_pallas_elements: int = _MIN_PALLAS_ELEMENTS) -> jax.Array:
    """Elementwise sigmoid (optionally hard-thresholded at 0.6) via a Pallas TPU kernel."""
    orig_shape = logits.shape
    orig_dtype = logits.dtype
    if not jnp.issubdtype(orig_dtype, jnp.floating):
        raise TypeError(f"sigmoid_pallas expects a floating dtype, got {orig_dtype}")

    n = logits.size
    if n == 0:
        return logits
    if n < min_pallas_elements:
        # Launch + reshape overhead dwarfs the work for tiny tensors.
        return _xla_fallback(logits, force_hard)

    itemsize = jnp.dtype(orig_dtype).itemsize
    # Native sublane granularity: 8 rows for 32-bit, 16 for bf16, 32 for 8-bit floats.
    sub = max(8, 32 // itemsize)

    # Pad only to lane (128) granularity, and only when actually misaligned.
    n_pad = pl.cdiv(n, _LANES) * _LANES
    flat = logits.reshape(-1)
    padded = n_pad != n
    if padded:
        flat = jnp.pad(flat, (0, n_pad - n))
    rows = n_pad // _LANES
    x2d = flat.reshape(rows, _LANES)

    # ---- Block sizing: byte budget, balanced across TensorCores. -------------
    budget_rows = max(sub, (_TARGET_BLOCK_BYTES // (_LANES * itemsize)) // sub * sub)
    steps = pl.cdiv(rows, budget_rows)
    n_cores = _num_tensorcores()
    if n_cores > 1 and rows > sub:
        # Keep an even load across the chip's TensorCores ("parallel" axis shards).
        steps = max(steps, n_cores)
        steps = pl.cdiv(steps, n_cores) * n_cores
    if steps <= 1:
        block_rows = rows            # full-extent block (may be < sub; allowed)
    else:
        block_rows = min(rows, pl.cdiv(pl.cdiv(rows, steps), sub) * sub)
    grid = (pl.cdiv(rows, block_rows),)

    cost = pl.CostEstimate(
        flops=(2 if force_hard else 5) * n_pad,
        transcendentals=0 if force_hard else n_pad,
        bytes_accessed=2 * n_pad * itemsize,
    )

    if orig_dtype == jnp.bfloat16 and _supports_native_bf16():
        compute_dtype = jnp.bfloat16
    else:
        compute_dtype = jnp.float32

    kernel = functools.partial(_sigmoid_kernel, hard=force_hard,
                               compute_dtype=compute_dtype)
    out2d = pl.pallas_call(
        kernel,
        out_shape=jax.ShapeDtypeStruct((rows, _LANES), orig_dtype),
        grid_spec=pltpu.PrefetchScalarGridSpec(
            num_scalar_prefetch=0,
            grid=grid,
            in_specs=[pl.BlockSpec((block_rows, _LANES), lambda i: (i, 0))],
            out_specs=pl.BlockSpec((block_rows, _LANES), lambda i: (i, 0)),
        ),
        compiler_params=pltpu.CompilerParams(
            dimension_semantics=("parallel",),
            vmem_limit_bytes=_VMEM_LIMIT_BYTES,
        ),
        cost_estimate=cost,
    )(x2d)

    out_flat = out2d.reshape(-1)
    if padded:
        out_flat = out_flat[:n]
    return out_flat.reshape(orig_shape)


if __name__ == "__main__":
    key = jax.random.PRNGKey(0)
    # NCHW logits, small shape: batch=2, channels=4, spatial=16x16
    x = jax.random.normal(key, (2, 4, 16, 16), dtype=jnp.float32)

    # Force the Pallas path on the small demo input (the default early-out would
    # route <64K-element tensors to plain XLA).
    out_soft = jax.block_until_ready(sigmoid_pallas(x, force_hard=False,
                                                    min_pallas_elements=0))
    out_hard = jax.block_until_ready(sigmoid_pallas(x, force_hard=True,
                                                    min_pallas_elements=0))

    # Reference checks in plain JAX (matching the PyTorch spec).
    ref_soft = jax.nn.sigmoid(x)
    ref_hard = jnp.where(ref_soft >= 0.6, 1.0, 0.0).astype(x.dtype)

    assert out_soft.shape == x.shape and out_soft.dtype == x.dtype
    assert out_hard.shape == x.shape and out_hard.dtype == x.dtype
    assert jnp.allclose(out_soft, ref_soft, atol=1e-6)
    # Hard path decides in logit space (exactly equivalent in real math); only
    # elements within float rounding of the 0.6 boundary may differ.
    near_boundary = jnp.abs(ref_soft - 0.6) < 1e-6
    assert bool(jnp.all((out_hard == ref_hard) | near_boundary))

    # Default auto-dispatch (small tensor -> XLA fallback) stays consistent.
    out_auto = jax.block_until_ready(sigmoid_pallas(x))
    assert jnp.allclose(out_auto, ref_soft, atol=1e-6)

    # Larger, non-128-aligned tensor exercises the Pallas pad/partial-block path.
    x_big = jax.random.normal(jax.random.PRNGKey(1), (3, 7, 61, 67), dtype=jnp.float32)
    out_big = jax.block_until_ready(sigmoid_pallas(x_big))
    assert jnp.allclose(out_big, jax.nn.sigmoid(x_big), atol=1e-6)
    out_big_hard = jax.block_until_ready(sigmoid_pallas(x_big, force_hard=True))
    ref_big_hard = jnp.where(jax.nn.sigmoid(x_big) >= 0.6, 1.0, 0.0).astype(x_big.dtype)
    near_big = jnp.abs(jax.nn.sigmoid(x_big) - 0.6) < 1e-6
    assert bool(jnp.all((out_big_hard == ref_big_hard) | near_big))

    # TODO(synk): backward straight-through estimator of HardSoftmax is autograd-only;
    # this kernel implements the forward pass.
    print("KERNEL_OK")
</pallas_src>

<mosaic_0001>
module attributes {stable_mosaic.version = 11 : i64} {
  func.func @_sigmoid_kernel(%arg0: i32, %arg1: memref<16x128xf32, #tpu.memory_space<vmem>>, %arg2: memref<16x128xf32, #tpu.memory_space<vmem>>) attributes {dimension_semantics = [#tpu.dimension_semantics<parallel>], iteration_bounds = array<i64: 1>, scalar_prefetch = 0 : i64, scratch_operands = 0 : i64, tpu.core_type = #tpu.core_type<tc>, window_params = [{transform_indices = @transform_0, window_bounds = array<i64: 16, 128>}, {transform_indices = @transform_1, window_bounds = array<i64: 16, 128>}]} {
    %c0 = arith.constant 0 : index
    %c0_0 = arith.constant 0 : index
    %0 = vector.load %arg1[%c0, %c0_0] : memref<16x128xf32, #tpu.memory_space<vmem>>, vector<16x128xf32>
    %cst = arith.constant 5.000000e-01 : f32
    %1 = vector.broadcast %cst : f32 to vector<16x128xf32>
    %2 = arith.mulf %0, %1 : vector<16x128xf32>
    %3 = math.tanh %2 : vector<16x128xf32>
    %cst_1 = arith.constant 1.000000e+00 : f32
    %4 = vector.broadcast %cst_1 : f32 to vector<16x128xf32>
    %5 = arith.addf %3, %4 : vector<16x128xf32>
    %cst_2 = arith.constant 5.000000e-01 : f32
    %6 = vector.broadcast %cst_2 : f32 to vector<16x128xf32>
    %7 = arith.mulf %6, %5 : vector<16x128xf32>
    %c0_3 = arith.constant 0 : index
    %c0_4 = arith.constant 0 : index
    %8 = vector.load %arg2[%c0_3, %c0_4] : memref<16x128xf32, #tpu.memory_space<vmem>>, vector<16x128xf32>
    tpu.vector_store %arg2[%c0_3, %c0_4], %7 {strides = array<i32>} : memref<16x128xf32, #tpu.memory_space<vmem>>, vector<16x128xf32>,
    return
  }
  func.func @transform_0(%arg0: i32) -> (i32, i32) {
    %c0_i32 = arith.constant 0 : i32
    %c0_i32_0 = arith.constant 0 : i32
    return %arg0, %c0_i32 : i32, i32
  }
  func.func @transform_1(%arg0: i32) -> (i32, i32) {
    %c0_i32 = arith.constant 0 : i32
    %c0_i32_0 = arith.constant 0 : i32
    return %arg0, %c0_i32 : i32, i32
  }
}

</mosaic_0001>

<llo_original>
// kernel: tpu_custom_call.1
$region0: #{tpu_custom_call.1}
  #allocation0 [shape = 'u32[]', space=smem, size = 0x4, offset = 0x4, fixed_abs, tag = 'smem constant byte address 0x4 - core index']
  #allocation1 [shape = 'u32[144,128]{1,0:T(1,128)}', space=vmem, size = 0x12000, scoped, tag = 'internal scratch']
  %s0 = inlined_call_operand.hbm [shape: f32[16,128], index: 0, kind: input, shape index: {}]
  %s1 = inlined_call_operand.hbm [shape: f32[16,128], index: 1, kind: output, shape index: {}]
  %s2 = sld [smem:[#allocation0]]
  $region18: #{tpu_custom_call.1} parent=0
    _
  %s4 = ssub.s32 1, %s2
  %s5 = scalar_select 0, %s4, %s2
  $region1: #{tpu_custom_call.1} parent=0
    #allocation2 [shape = 'u8[8192]{0}', space=vmem, size = 0x2000, scoped, tag = 'input window, operand 0, single buffered']
    #allocation3 [shape = 's32[1]{0}', space=sflag, size = 0x4, scoped, tag = 'scoped memory for tpu_custom_call.1']
    #allocation4 [shape = 's32[1]{0}', space=sflag, size = 0x4, scoped, tag = 'scoped memory for tpu_custom_call.1']
    #allocation5 [shape = 'u8[8192]{0}', space=vmem, size = 0x2000, scoped, tag = 'output window, operand 0, single buffered']
    %6 = vsyncpa [#allocation3], 0
    %7 = vsyncpa [#allocation4], 0
    // Predicated region
    $region2: #{tpu_custom_call.1} parent=1 // pred_check
      _
    $region3: #{tpu_custom_call.1} parent=1 // pred_check_branch
      %9 = sbr.rel (0) target = $region5
    $region4: #{tpu_custom_call.1} parent=1 // pred_region
      %s11 = ssub.s32 256, 256
      %12 = vsyncadd [#allocation3], %s11
      %s13 = sshll.u32 [#allocation2], 4
      %s14 = int_to_ptr.vmem [resolvable:$true] %s13
      %19 = dma.hbm_to_vmem [thread:$0]  %s0, 256, %s14, [#allocation3], 128, 128, 8
    $region5: #{tpu_custom_call.1} parent=1 // pred_fallthru
      _
    // Predicated region
    $region6: #{tpu_custom_call.1} parent=1 // pred_check
      _
    $region7: #{tpu_custom_call.1} parent=1 // pred_check_branch
      %21 = sbr.rel (0) target = $region9
    $region8: #{tpu_custom_call.1} parent=1 // pred_region
      %22 = dma.done [#allocation3], 256
    $region9: #{tpu_custom_call.1} parent=1 // pred_fallthru
      _
    %v23 = vld [vmem:[#allocation2] sm:$0xff]
    %v24 = vld [vmem:[#allocation2 + $0x8] sm:$0xff]
    %v25 = vmul.f32 %v23, 0.5
    %v26 = vmul.f32 %v24, 0.5
    %v27 = vtanh.pop %v25
    %v28 = vtanh.pop %v26
    %v29 = vadd.f32 %v27, 1.0
    %v30 = vadd.f32 %v28, 1.0
    %v31 = vmul.f32 %v29, 0.5
    %v32 = vmul.f32 %v30, 0.5
    %33 = vst [vmem:[#allocation5] sm:$0xff] %v31
    %34 = vst [vmem:[#allocation5 + $0x8] sm:$0xff] %v32
    // Predicated region
    $region10: #{tpu_custom_call.1} parent=1 // pred_check
      _
    $region11: #{tpu_custom_call.1} parent=1 // pred_check_branch
      %36 = sbr.rel (0) target = $region13
    $region12: #{tpu_custom_call.1} parent=1 // pred_region
      %s38 = ssub.s32 256, 256
      %39 = vsyncadd [#allocation4], %s38
      %s40 = sshll.u32 [#allocation5], 4
      %s41 = int_to_ptr.vmem [resolvable:$true] %s40
      %46 = dma.vmem_to_hbm [thread:$0]  %s41, 256, %s1, [#allocation4], 128, 128, 8
    $region13: #{tpu_custom_call.1} parent=1 // pred_fallthru
      _
    // Predicated region
    $region14: #{tpu_custom_call.1} parent=1 // pred_check
      _
    $region15: #{tpu_custom_call.1} parent=1 // pred_check_branch
      %48 = sbr.rel (0) target = $region17
    $region16: #{tpu_custom_call.1} parent=1 // pred_region
      %49 = dma.done [#allocation4], 256
    $region17: #{tpu_custom_call.1} parent=1 // pred_fallthru
      _
    %50 = vsyncpa [#allocation3], 1
    %51 = vsyncpa [#allocation4], 1

</llo_original>
